<compile_context>
chip_gen: v6e
topology: v6e:2x2x1
jax: 0.10.0
libtpu: 0.0.40
codegen_flags: <defaults>
</compile_context>

<pallas_src>
import math

import jax
import jax.numpy as jnp
from jax.experimental import pallas as pl
from jax.experimental.pallas import tpu as pltpu


def _round_up(n, m):
    return ((n + m - 1) // m) * m


def _net_kernel(x_ref, xi_ref, b_ref, w1_ref, w2_ref, o_ref):
    # Two MXU matmuls with f32 accumulation; bias broadcast-add on the VPU.
    s = jnp.dot(x_ref[...], w1_ref[...], preferred_element_type=jnp.float32)
    s = s + jnp.dot(xi_ref[...], w2_ref[...], preferred_element_type=jnp.float32)
    s = s + b_ref[...]  # (1, D) f32 bias row, broadcast over the batch tile

    # Numerically stable softmax over the last (lane) dimension — all math in f32,
    # exact division so every row sums to 1 to f32 precision.
    s = s - jnp.max(s, axis=-1, keepdims=True)
    e = jnp.exp(s)
    o_ref[...] = (e / jnp.sum(e, axis=-1, keepdims=True)).astype(o_ref.dtype)


def net_forward(x, xi, w1_t, b1, w2_t, b2, *, block_b=4096,
                compute_dtype=jnp.bfloat16):
    """softmax(x @ w1_t + b1 + xi @ w2_t + b2, axis=-1) as a single Pallas kernel.

    w1_t, w2_t are the PyTorch weights pre-transposed to (in_features, out_features).
    Operands are fed to the MXU in `compute_dtype` (bf16 by default); accumulation
    and the softmax are f32; the output is f32.
    """
    B, D = x.shape
    assert xi.shape == (B, D)
    assert w1_t.shape == (D, D) and w2_t.shape == (D, D)
    assert b1.shape == (D,) and b2.shape == (D,)

    # ---- operand prep (weight-side fusion only; no activation copies) ----------
    xb = x.astype(compute_dtype)
    xib = xi.astype(compute_dtype)
    w1b = w1_t.astype(compute_dtype)
    w2b = w2_t.astype(compute_dtype)
    bias = (b1 + b2).astype(jnp.float32).reshape(1, D)  # fused bias row, stays f32

    # ---- batch tiling -----------------------------------------------------------
    if B <= 512:
        tb = B  # tiny batch: single grid step, block = full array
    else:
        # Big tiles to amortize per-step overhead, but always >= 2 steps so the
        # "parallel" axis can be sharded across both v7x TensorCores.
        tb = min(block_b, _round_up(pl.cdiv(B, 2), 256))
    num_blocks = pl.cdiv(B, tb)

    itemsize = jnp.dtype(compute_dtype).itemsize
    cost = pl.CostEstimate(
        flops=4 * B * D * D,                       # two (B,D)x(D,D) matmuls
        transcendentals=B * D,                     # exp in the softmax
        bytes_accessed=(2 * B * D * itemsize       # x, xi
                        + 2 * D * D * itemsize     # w1, w2
                        + D * 4                    # fused bias
                        + B * D * 4),              # f32 output
    )

    out = pl.pallas_call(
        _net_kernel,
        out_shape=jax.ShapeDtypeStruct((B, D), jnp.float32),
        grid=(num_blocks,),
        in_specs=[
            pl.BlockSpec((tb, D), lambda i: (i, 0)),  # x tile
            pl.BlockSpec((tb, D), lambda i: (i, 0)),  # xi tile
            pl.BlockSpec((1, D), lambda i: (0, 0)),   # fused bias (resident)
            pl.BlockSpec((D, D), lambda i: (0, 0)),   # w1_t (resident)
            pl.BlockSpec((D, D), lambda i: (0, 0)),   # w2_t (resident)
        ],
        out_specs=pl.BlockSpec((tb, D), lambda i: (i, 0)),
        compiler_params=pltpu.CompilerParams(
            dimension_semantics=("parallel",),   # megacore-shardable batch axis
            vmem_limit_bytes=32 * 1024 * 1024,   # headroom for big tiles on v5e
        ),
        cost_estimate=cost,
    )(xb, xib, bias, w1b, w2b)
    return out


def init_linear_params(key, in_features, out_features):
    """Deterministic init mimicking PyTorch nn.Linear defaults (uniform +-1/sqrt(fan_in))."""
    kw, kb = jax.random.split(key)
    bound = 1.0 / math.sqrt(in_features)
    # PyTorch stores weight as (out, in); we keep the transposed (in, out) form
    # so the kernel computes x @ W_T directly.
    w_t = jax.random.uniform(kw, (in_features, out_features),
                             minval=-bound, maxval=bound, dtype=jnp.float32)
    b = jax.random.uniform(kb, (out_features,),
                           minval=-bound, maxval=bound, dtype=jnp.float32)
    return w_t, b


if __name__ == "__main__":
    key = jax.random.PRNGKey(0)
    k_x, k_xi, k_fc1, k_fc2 = jax.random.split(key, 4)

    B, D = 8, 32  # hidden=32 fixed by the module; small demo batch
    x = jax.random.normal(k_x, (B, D), dtype=jnp.float32)
    xi = jax.random.normal(k_xi, (B, D), dtype=jnp.float32)

    w1_t, b1 = init_linear_params(k_fc1, D, D)
    w2_t, b2 = init_linear_params(k_fc2, D, D)

    out = jax.block_until_ready(net_forward(x, xi, w1_t, b1, w2_t, b2))

    # Reference check in plain JAX (same math as the PyTorch module, full f32).
    ref = jax.nn.softmax(x @ w1_t + b1 + xi @ w2_t + b2, axis=-1)
    assert out.shape == (B, D)
    # Tolerance 1e-2 covers the bf16 operand feed; softmax itself is exact f32.
    assert jnp.allclose(out, ref, atol=1e-2, rtol=1e-2), "mismatch vs reference"
    # Exact f32 normalization: rows sum to 1 to f32 precision.
    assert jnp.allclose(jnp.sum(out, axis=-1), 1.0, atol=1e-5), "softmax rows must sum to 1"

    print("KERNEL_OK")
</pallas_src>

<mosaic_0001>
module attributes {stable_mosaic.version = 11 : i64} {
  func.func @_net_kernel(%arg0: i32, %arg1: memref<8x32xbf16, #tpu.memory_space<vmem>>, %arg2: memref<8x32xbf16, #tpu.memory_space<vmem>>, %arg3: memref<1x32xf32, #tpu.memory_space<vmem>>, %arg4: memref<32x32xbf16, #tpu.memory_space<vmem>>, %arg5: memref<32x32xbf16, #tpu.memory_space<vmem>>, %arg6: memref<8x32xf32, #tpu.memory_space<vmem>>) attributes {dimension_semantics = [#tpu.dimension_semantics<parallel>], iteration_bounds = array<i64: 1>, scalar_prefetch = 0 : i64, scratch_operands = 0 : i64, tpu.core_type = #tpu.core_type<tc>, window_params = [{transform_indices = @transform_0, window_bounds = array<i64: 8, 32>}, {transform_indices = @transform_1, window_bounds = array<i64: 8, 32>}, {pipeline_mode = #tpu.pipeline_mode<synchronous>, transform_indices = @transform_2, window_bounds = array<i64: 1, 32>}, {pipeline_mode = #tpu.pipeline_mode<synchronous>, transform_indices = @transform_3, window_bounds = array<i64: 32, 32>}, {pipeline_mode = #tpu.pipeline_mode<synchronous>, transform_indices = @transform_4, window_bounds = array<i64: 32, 32>}, {transform_indices = @transform_5, window_bounds = array<i64: 8, 32>}]} {
    %c0 = arith.constant 0 : index
    %c0_0 = arith.constant 0 : index
    %0 = vector.load %arg1[%c0, %c0_0] : memref<8x32xbf16, #tpu.memory_space<vmem>>, vector<8x32xbf16>
    %c0_1 = arith.constant 0 : index
    %c0_2 = arith.constant 0 : index
    %1 = vector.load %arg4[%c0_1, %c0_2] : memref<32x32xbf16, #tpu.memory_space<vmem>>, vector<32x32xbf16>
    %cst = arith.constant dense<0.000000e+00> : vector<8x32xf32>
    %2 = tpu.matmul %0, %1, %cst {dimension_numbers = #tpu.dot_dimension_numbers<[1], [0], [0], [1], [0, 0, 1, 1], [], []>} : vector<8x32xbf16>, vector<32x32xbf16>, vector<8x32xf32> -> vector<8x32xf32>
    %c0_3 = arith.constant 0 : index
    %c0_4 = arith.constant 0 : index
    %3 = vector.load %arg2[%c0_3, %c0_4] : memref<8x32xbf16, #tpu.memory_space<vmem>>, vector<8x32xbf16>
    %c0_5 = arith.constant 0 : index
    %c0_6 = arith.constant 0 : index
    %4 = vector.load %arg5[%c0_5, %c0_6] : memref<32x32xbf16, #tpu.memory_space<vmem>>, vector<32x32xbf16>
    %cst_7 = arith.constant dense<0.000000e+00> : vector<8x32xf32>
    %5 = tpu.matmul %3, %4, %cst_7 {dimension_numbers = #tpu.dot_dimension_numbers<[1], [0], [0], [1], [0, 0, 1, 1], [], []>} : vector<8x32xbf16>, vector<32x32xbf16>, vector<8x32xf32> -> vector<8x32xf32>
    %6 = arith.addf %2, %5 : vector<8x32xf32>
    %c0_8 = arith.constant 0 : index
    %c0_9 = arith.constant 0 : index
    %7 = vector.load %arg3[%c0_8, %c0_9] : memref<1x32xf32, #tpu.memory_space<vmem>>, vector<1x32xf32>
    %8 = vector.broadcast %7 : vector<1x32xf32> to vector<8x32xf32>
    %9 = arith.addf %6, %8 : vector<8x32xf32>
    %cst_10 = arith.constant dense<0xFF800000> : vector<8xf32>
    %10 = vector.multi_reduction <maximumf>, %9, %cst_10 [1] : vector<8x32xf32> to vector<8xf32>
    %11 = vector.shape_cast %10 : vector<8xf32> to vector<8x1xf32>
    %12 = vector.broadcast %11 : vector<8x1xf32> to vector<8x32xf32>
    %13 = arith.subf %9, %12 : vector<8x32xf32>
    %14 = math.exp %13 : vector<8x32xf32>
    %cst_11 = arith.constant dense<0.000000e+00> : vector<8xf32>
    %15 = vector.multi_reduction <add>, %14, %cst_11 [1] : vector<8x32xf32> to vector<8xf32>
    %16 = vector.shape_cast %15 : vector<8xf32> to vector<8x1xf32>
    %17 = vector.broadcast %16 : vector<8x1xf32> to vector<8x32xf32>
    %18 = arith.divf %14, %17 : vector<8x32xf32>
    %c0_12 = arith.constant 0 : index
    %c0_13 = arith.constant 0 : index
    %19 = vector.load %arg6[%c0_12, %c0_13] : memref<8x32xf32, #tpu.memory_space<vmem>>, vector<8x32xf32>
    tpu.vector_store %arg6[%c0_12, %c0_13], %18 {strides = array<i32>} : memref<8x32xf32, #tpu.memory_space<vmem>>, vector<8x32xf32>,
    return
  }
  func.func @transform_0(%arg0: i32) -> (i32, i32) {
    %c0_i32 = arith.constant 0 : i32
    %c0_i32_0 = arith.constant 0 : i32
    return %arg0, %c0_i32 : i32, i32
  }
  func.func @transform_1(%arg0: i32) -> (i32, i32) {
    %c0_i32 = arith.constant 0 : i32
    %c0_i32_0 = arith.constant 0 : i32
    return %arg0, %c0_i32 : i32, i32
  }
  func.func @transform_2(%arg0: i32) -> (i32, i32) {
    %c0_i32 = arith.constant 0 : i32
    %c0_i32_0 = arith.constant 0 : i32
    %c0_i32_1 = arith.constant 0 : i32
    return %c0_i32, %c0_i32_0 : i32, i32
  }
  func.func @transform_3(%arg0: i32) -> (i32, i32) {
    %c0_i32 = arith.constant 0 : i32
    %c0_i32_0 = arith.constant 0 : i32
    %c0_i32_1 = arith.constant 0 : i32
    return %c0_i32, %c0_i32_0 : i32, i32
  }
  func.func @transform_4(%arg0: i32) -> (i32, i32) {
    %c0_i32 = arith.constant 0 : i32
    %c0_i32_0 = arith.constant 0 : i32
    %c0_i32_1 = arith.constant 0 : i32
    return %c0_i32, %c0_i32_0 : i32, i32
  }
  func.func @transform_5(%arg0: i32) -> (i32, i32) {
    %c0_i32 = arith.constant 0 : i32
    %c0_i32_0 = arith.constant 0 : i32
    return %arg0, %c0_i32 : i32, i32
  }
}

</mosaic_0001>

<llo_original>
// kernel: tpu_custom_call.1
$region0: #{tpu_custom_call.1}
  #allocation0 [shape = 'u32[]', space=smem, size = 0x4, offset = 0x4, fixed_abs, tag = 'smem constant byte address 0x4 - core index']
  #allocation1 [shape = 'u32[144,128]{1,0:T(1,128)}', space=vmem, size = 0x12000, scoped, tag = 'internal scratch']
  %s0 = inlined_call_operand.hbm [shape: bf16[8,32], index: 0, kind: input, shape index: {}]
  %s1 = inlined_call_operand.hbm [shape: bf16[8,32], index: 1, kind: input, shape index: {}]
  %s2 = inlined_call_operand.vmem [shape: f32[1,32], index: 2, kind: input, shape index: {}]
  %s3 = inlined_call_operand.hbm [shape: bf16[32,32], index: 3, kind: input, shape index: {}]
  %s4 = inlined_call_operand.hbm [shape: bf16[32,32], index: 4, kind: input, shape index: {}]
  %s5 = inlined_call_operand.hbm [shape: f32[8,32], index: 5, kind: output, shape index: {}]
  %s6 = sld [smem:[#allocation0]]
  $region46: #{tpu_custom_call.1} parent=0
    _
  %s8 = ssub.s32 1, %s6
  %s9 = scalar_select 0, %s8, %s6
  $region1: #{tpu_custom_call.1} parent=0
    #allocation2 [shape = 'u8[2048]{0}', space=vmem, size = 0x800, scoped, tag = 'input window, operand 0, single buffered']
    #allocation3 [shape = 's32[1]{0}', space=sflag, size = 0x4, scoped, tag = 'scoped memory for tpu_custom_call.1']
    #allocation4 [shape = 's32[1]{0}', space=sflag, size = 0x4, scoped, tag = 'scoped memory for tpu_custom_call.1']
    #allocation5 [shape = 'u8[2048]{0}', space=vmem, size = 0x800, scoped, tag = 'input window, operand 1, single buffered']
    #allocation6 [shape = 's32[1]{0}', space=sflag, size = 0x4, scoped, tag = 'scoped memory for tpu_custom_call.1']
    #allocation7 [shape = 'u8[8192]{0}', space=vmem, size = 0x2000, scoped, tag = 'input window, operand 3, single buffered']
    #allocation8 [shape = 'u8[8192]{0}', space=vmem, size = 0x2000, scoped, tag = 'input window, operand 4, single buffered']
    #allocation9 [shape = 's32[1]{0}', space=sflag, size = 0x4, scoped, tag = 'scoped memory for tpu_custom_call.1']
    #allocation10 [shape = 'u8[4096]{0}', space=vmem, size = 0x1000, scoped, tag = 'output window, operand 0, single buffered']
    %10 = vsyncpa [#allocation3], 0
    %11 = vsyncpa [#allocation6], 0
    %12 = vsyncpa [#allocation9], 0
    %13 = vsyncpa [#allocation4], 0
    // Predicated region
    $region2: #{tpu_custom_call.1} parent=1 // pred_check
      _
    $region3: #{tpu_custom_call.1} parent=1 // pred_check_branch
      %15 = sbr.rel (0) target = $region5
    $region4: #{tpu_custom_call.1} parent=1 // pred_region
      %s17 = ssub.s32 64, 64
      %18 = vsyncadd [#allocation3], %s17
      %s20 = sshll.u32 [#allocation2], 4
      %s21 = int_to_ptr.vmem [resolvable:$true] %s20
      %23 = dma.hbm_to_vmem [thread:$0]  %s0, 64, %s21, [#allocation3]
    $region5: #{tpu_custom_call.1} parent=1 // pred_fallthru
      _
    // Predicated region
    $region6: #{tpu_custom_call.1} parent=1 // pred_check
      _
    $region7: #{tpu_custom_call.1} parent=1 // pred_check_branch
      %25 = sbr.rel (0) target = $region9
    $region8: #{tpu_custom_call.1} parent=1 // pred_region
      %s27 = ssub.s32 64, 64
      %28 = vsyncadd [#allocation6], %s27
      %s30 = sshll.u32 [#allocation5], 4
      %s31 = int_to_ptr.vmem [resolvable:$true] %s30
      %33 = dma.hbm_to_vmem [thread:$0]  %s1, 64, %s31, [#allocation6]
    $region9: #{tpu_custom_call.1} parent=1 // pred_fallthru
      _
    // Predicated region
    $region10: #{tpu_custom_call.1} parent=1 // pred_check
      _
    $region11: #{tpu_custom_call.1} parent=1 // pred_check_branch
      %35 = sbr.rel (0) target = $region13
    $region12: #{tpu_custom_call.1} parent=1 // pred_region
      _
    $region13: #{tpu_custom_call.1} parent=1 // pred_fallthru
      _
    // Predicated region
    $region14: #{tpu_custom_call.1} parent=1 // pred_check
      _
    $region15: #{tpu_custom_call.1} parent=1 // pred_check_branch
      %37 = sbr.rel (0) target = $region17
    $region16: #{tpu_custom_call.1} parent=1 // pred_region
      %s39 = ssub.s32 256, 256
      %40 = vsyncadd [#allocation6], %s39
      %s41 = sshll.u32 [#allocation7], 4
      %s42 = int_to_ptr.vmem [resolvable:$true] %s41
      %47 = dma.hbm_to_vmem [thread:$0]  %s3, 256, %s42, [#allocation6], 64, 64, 4
    $region17: #{tpu_custom_call.1} parent=1 // pred_fallthru
      _
    // Predicated region
    $region18: #{tpu_custom_call.1} parent=1 // pred_check
      _
    $region19: #{tpu_custom_call.1} parent=1 // pred_check_branch
      %49 = sbr.rel (0) target = $region21
    $region20: #{tpu_custom_call.1} parent=1 // pred_region
      %s51 = ssub.s32 256, 256
      %52 = vsyncadd [#allocation9], %s51
      %s53 = sshll.u32 [#allocation8], 4
      %s54 = int_to_ptr.vmem [resolvable:$true] %s53
      %59 = dma.hbm_to_vmem [thread:$0]  %s4, 256, %s54, [#allocation9], 64, 64, 4
    $region21: #{tpu_custom_call.1} parent=1 // pred_fallthru
      _
    // Predicated region
    $region22: #{tpu_custom_call.1} parent=1 // pred_check
      _
    $region23: #{tpu_custom_call.1} parent=1 // pred_check_branch
      %61 = sbr.rel (0) target = $region25
    $region24: #{tpu_custom_call.1} parent=1 // pred_region
      %62 = dma.done [#allocation3], 64
    $region25: #{tpu_custom_call.1} parent=1 // pred_fallthru
      _
    // Predicated region
    $region26: #{tpu_custom_call.1} parent=1 // pred_check
      _
    $region27: #{tpu_custom_call.1} parent=1 // pred_check_branch
      %64 = sbr.rel (0) target = $region29
    $region28: #{tpu_custom_call.1} parent=1 // pred_region
      %65 = dma.done [#allocation6], 64
    $region29: #{tpu_custom_call.1} parent=1 // pred_fallthru
      _
    // Predicated region
    $region30: #{tpu_custom_call.1} parent=1 // pred_check
      _
    $region31: #{tpu_custom_call.1} parent=1 // pred_check_branch
      %67 = sbr.rel (0) target = $region33
    $region32: #{tpu_custom_call.1} parent=1 // pred_region
      %68 = dma.done [#allocation6], 256
    $region33: #{tpu_custom_call.1} parent=1 // pred_fallthru
      _
    // Predicated region
    $region34: #{tpu_custom_call.1} parent=1 // pred_check
      _
    $region35: #{tpu_custom_call.1} parent=1 // pred_check_branch
      %70 = sbr.rel (0) target = $region37
    $region36: #{tpu_custom_call.1} parent=1 // pred_region
      %71 = dma.done [#allocation9], 256
    $region37: #{tpu_custom_call.1} parent=1 // pred_fallthru
      _
    %v73 = vld [vmem:[#allocation2] sm:$0xf]
    %v74 = vld [vmem:[#allocation7] sm:$0xf]
    %v75 = vld [vmem:[#allocation7 + $0x4] sm:$0xf]
    %v76 = vld [vmem:[#allocation7 + $0x8] sm:$0xf]
    %v77 = vld [vmem:[#allocation7 + $0xc] sm:$0xf]
    %v78 = vld [vmem:[#allocation5] sm:$0xf]
    %v79 = vld [vmem:[#allocation8] sm:$0xf]
    %v80 = vld [vmem:[#allocation8 + $0x4] sm:$0xf]
    %v81 = vld [vmem:[#allocation8 + $0x8] sm:$0xf]
    %v82 = vld [vmem:[#allocation8 + $0xc] sm:$0xf]
    %v87 = vunpack.c.l.b16 %v79
    %v88 = vunpack.c.l.b16 %v80
    %v89 = vunpack.c.l.b16 %v81
    %v90 = vunpack.c.l.b16 %v82
    %v91 = vpack.c.b16 %v88, %v87
    %v92 = vpack.c.b16 %v90, %v89
    %vm95 = vcmask 261120
    %v97 = vsel %vm95, %v78, 0
    %99 = vmatprep.subr.bf16.mxu0 0
    %100 = vmatpush1.bf16.msra.mxu0 0
    %101 = vmatprep.subr.bf16.mxu0 0
    %102 = vmatpush1.bf16.msra.mxu0 0
    %103 = vmatprep.subr.bf16.mxu0 0
    %104 = vmatpush1.bf16.msra.mxu0 0
    %105 = vmatprep.subr.bf16.mxu0 0
    %106 = vmatpush1.bf16.msra.mxu0 0
    %107 = vmatprep.subr.bf16.mxu0 0
    %108 = vmatpush1.bf16.msra.mxu0 0
    %109 = vmatprep.subr.bf16.mxu0 0
    %110 = vmatpush1.bf16.msra.mxu0 0
    %111 = vmatprep.subr.bf16.mxu0 0
    %112 = vmatpush1.bf16.msra.mxu0 %v92
    %113 = vmatprep.subr.bf16.mxu0 0
    %114 = vmatpush1.bf16.msra.mxu0 %v91
    %115 = vmatprep.subr.bf16.mxu0 0
    %116 = vmatpush2.bf16.msra.mxu0 0
    %117 = vmatprep.subr.bf16.mxu0 0
    %118 = vmatpush2.bf16.msra.mxu0 0
    %119 = vmatprep.subr.bf16.mxu0 0
    %120 = vmatpush2.bf16.msra.mxu0 0
    %121 = vmatprep.subr.bf16.mxu0 0
    %122 = vmatpush2.bf16.msra.mxu0 0
    %123 = vmatprep.subr.bf16.mxu0 0
    %124 = vmatpush2.bf16.msra.mxu0 0
    %125 = vmatprep.subr.bf16.mxu0 0
    %126 = vmatpush2.bf16.msra.mxu0 0
    %127 = vmatprep.subr.bf16.mxu0 0
    %128 = vmatpush2.bf16.msra.mxu0 0
    %129 = vmatprep.subr.bf16.mxu0 0
    %130 = vmatpush2.bf16.msra.mxu0 0
    %131 = vmatprep.mubr.bf16.mxu0 0
    %132 = vmatmul.mubr.bf16.gmra.mxu0 %v97
    %v133 = vpop.f32.mrf.mxu0
    %v134 = vadd.f32 0.0, %v133
    %v135 = vpop.f32.mrf.mxu0
    %v136 = vpop.f32.mrf.mxu0
    %v137 = vpop.f32.mrf.mxu0
    %138 = vdwg.mxu0
    %v143 = vunpack.c.l.b16 %v74
    %v144 = vunpack.c.l.b16 %v75
    %v145 = vunpack.c.l.b16 %v76
    %v146 = vunpack.c.l.b16 %v77
    %v147 = vpack.c.b16 %v144, %v143
    %v148 = vpack.c.b16 %v146, %v145
    %v152 = vsel %vm95, %v73, 0
    %154 = vmatprep.subr.bf16.mxu0 0
    %155 = vmatpush1.bf16.msra.mxu0 0
    %156 = vmatprep.subr.bf16.mxu0 0
    %157 = vmatpush1.bf16.msra.mxu0 0
    %158 = vmatprep.subr.bf16.mxu0 0
    %159 = vmatpush1.bf16.msra.mxu0 0
    %160 = vmatprep.subr.bf16.mxu0 0
    %161 = vmatpush1.bf16.msra.mxu0 0
    %162 = vmatprep.subr.bf16.mxu0 0
    %163 = vmatpush1.bf16.msra.mxu0 0
    %164 = vmatprep.subr.bf16.mxu0 0
    %165 = vmatpush1.bf16.msra.mxu0 0
    %166 = vmatprep.subr.bf16.mxu0 0
    %167 = vmatpush1.bf16.msra.mxu0 %v148
    %168 = vmatprep.subr.bf16.mxu0 0
    %169 = vmatpush1.bf16.msra.mxu0 %v147
    %170 = vmatprep.subr.bf16.mxu0 0
    %171 = vmatpush2.bf16.msra.mxu0 0
    %172 = vmatprep.subr.bf16.mxu0 0
    %173 = vmatpush2.bf16.msra.mxu0 0
    %174 = vmatprep.subr.bf16.mxu0 0
    %175 = vmatpush2.bf16.msra.mxu0 0
    %176 = vmatprep.subr.bf16.mxu0 0
    %177 = vmatpush2.bf16.msra.mxu0 0
    %178 = vmatprep.subr.bf16.mxu0 0
    %179 = vmatpush2.bf16.msra.mxu0 0
    %180 = vmatprep.subr.bf16.mxu0 0
    %181 = vmatpush2.bf16.msra.mxu0 0
    %182 = vmatprep.subr.bf16.mxu0 0
    %183 = vmatpush2.bf16.msra.mxu0 0
    %184 = vmatprep.subr.bf16.mxu0 0
    %185 = vmatpush2.bf16.msra.mxu0 0
    %186 = vmatprep.mubr.bf16.mxu0 0
    %187 = vmatmul.mubr.bf16.gmra.mxu0 %v152
    %v188 = vpop.f32.mrf.mxu0
    %v189 = vadd.f32 %v134, %v188
    %v190 = vpop.f32.mrf.mxu0
    %v191 = vpop.f32.mrf.mxu0
    %v192 = vpop.f32.mrf.mxu0
    %193 = vdwg.mxu0
    %v194 = vld [vmem:[%s2] sm:$0x1]
    %v196 = vlaneseq
    %v197 = vshrl.u32 %v196, 7
    %v198 = vsub.s32 0, %v197
    %v199 = vrot.slane %v194, %v198
    %v201 = vadd.f32 %v189, %v199
    %v202 = vsel %vm95, %v201, -inf
    %203 = vmax.xlane.f32.xlu0 %v202
    %v204 = vpop.xlane.xlu0 %203
    %v205 = vsub.f32 %v201, %v204
    %v206 = vmul.f32 %v205, 1.442695
    %v207 = vpow.pop %v206
    %v208 = vsel %vm95, %v207, 0.0
    %209 = vadd.xlane.f32.xlu0 %v208
    %v210 = vpop.xlane.xlu0 %209
    %v211 = vrcp.pop %v210
    %v212 = vmul.f32 %v207, %v211
    %213 = vst.msk [vmem:[#allocation10] sm:$0xff] %vm95, %v212
    // Predicated region
    $region38: #{tpu_custom_call.1} parent=1 // pred_check
      _
    $region39: #{tpu_custom_call.1} parent=1 // pred_check_branch
      %215 = sbr.rel (0) target = $region41
    $region40: #{tpu_custom_call.1} parent=1 // pred_region
      %s217 = ssub.s32 128, 128
      %218 = vsyncadd [#allocation4], %s217
      %s220 = sshll.u32 [#allocation10], 4
      %s221 = int_to_ptr.vmem [resolvable:$true] %s220
      %223 = dma.vmem_to_hbm [thread:$0]  %s221, 128, %s5, [#allocation4]
    $region41: #{tpu_custom_call.1} parent=1 // pred_fallthru
      _
    // Predicated region
    $region42: #{tpu_custom_call.1} parent=1 // pred_check
      _
    $region43: #{tpu_custom_call.1} parent=1 // pred_check_branch
      %225 = sbr.rel (0) target = $region45
    $region44: #{tpu_custom_call.1} parent=1 // pred_region
      %226 = dma.done [#allocation4], 128
    $region45: #{tpu_custom_call.1} parent=1 // pred_fallthru
      _
    %227 = vsyncpa [#allocation3], 1
    %228 = vsyncpa [#allocation6], 1
    %229 = vsyncpa [#allocation9], 1
    %230 = vsyncpa [#allocation4], 1

</llo_original>
